<compile_context>
chip_gen: v5e
topology: v5e:2x2
jax: 0.10.0
libtpu: 0.0.40
codegen_flags: <defaults>
</compile_context>

<pallas_src>
import functools
import math

import jax
import jax.numpy as jnp
from jax import lax
from jax.experimental import pallas as pl
from jax.experimental.pallas import tpu as pltpu


def _attn_kernel(q_ref, k_ref, v_ref, m_ref, o_ref, *, mxu_dtype):
    # q_ref/m_ref/o_ref: (1, 1, tq, S) tiles; k_ref/v_ref: (1, 1, S, S) tiles.
    q = q_ref[0, 0]                           # (tq, D), D == S
    k = k_ref[0, 0]                           # (S, D)
    v = v_ref[0, 0]                           # (S, D)
    m = m_ref[0, 0].astype(jnp.float32)       # (tq, S)

    d = q.shape[-1]
    inv_sqrt_d = jnp.float32(1.0 / math.sqrt(d))

    qc = q.astype(mxu_dtype)
    kc = k.astype(mxu_dtype)
    vc = v.astype(mxu_dtype)

    # qk = q @ k^T / sqrt(D) + mask   (NT form: contract last dims, no explicit
    # k transpose through the XLU).
    qk = lax.dot_general(
        qc, kc,
        dimension_numbers=(((1,), (1,)), ((), ())),
        preferred_element_type=jnp.float32,
    ) * inv_sqrt_d + m                        # (tq, S) f32

    # attn_weight = qk @ v
    aw = lax.dot_general(
        qk.astype(mxu_dtype), vc,
        dimension_numbers=(((1,), (0,)), ((), ())),
        preferred_element_type=jnp.float32,
    )                                         # (tq, D) f32

    # masked_fill_(mask == 0.0, -1e9)   (exact float equality, as in torch)
    aw = jnp.where(m == jnp.float32(0.0), jnp.float32(-1000000000.0), aw)

    # softmax over last axis in float32 (matches torch's .float() softmax)
    aw = aw - jnp.max(aw, axis=-1, keepdims=True)
    e = jnp.exp(aw)
    p = e * pl.reciprocal(jnp.sum(e, axis=-1, keepdims=True), approx=True)

    # output = attn_weight @ v   (attn_weight cast back down before the MXU)
    out = lax.dot_general(
        p.astype(mxu_dtype), vc,
        dimension_numbers=(((1,), (0,)), ((), ())),
        preferred_element_type=jnp.float32,
    )
    o_ref[0, 0] = out.astype(o_ref.dtype)


def _pick_tiling(S, in_itemsize, mxu_itemsize):
    """Pick the q-row tile and a VMEM limit from the chip's actual capacity."""
    try:
        info = pltpu.get_tpu_info()
        vmem_cap = int(getattr(info, "vmem_capacity_bytes", 64 << 20))
    except Exception:
        vmem_cap = 64 << 20          # conservative fallback = v7x per-TC VMEM
    budget = vmem_cap - (8 << 20)    # headroom for Mosaic internal scratch

    def need(tq):
        # double-buffered BlockSpec refs: q, mask, out (tq,S) + k, v (S,S)
        refs = (3 * 2 * tq * S + 2 * 2 * S * S) * in_itemsize
        # in-kernel f32 temporaries (qk, e, p, staged out) + MXU-dtype casts
        tmps = 4 * tq * S * 4 + (3 * tq * S + 2 * S * S) * mxu_itemsize
        return refs + tmps

    # Prefer the full-S row block; otherwise MXU-aligned row tiles (multiples
    # of 256 for v6e/v7x's 256x256 MXU, 128 for v5e's 128x128 MXU).
    candidates = [S] + [t for t in (512, 256, 128) if t < S and S % t == 0]
    tq = candidates[-1]
    for cand in candidates:
        if need(cand) <= budget:
            tq = cand
            break

    n = need(tq)
    vmem_limit = int(min(max(n + (8 << 20), 32 << 20), vmem_cap - (4 << 20)))
    return tq, n, vmem_limit


def attention_model(q, k, v, mask, *, mxu_dtype=jnp.bfloat16):
    """q, k, v: (B, H, S, S); mask: (1, H, S, S) or (B, H, S, S).

    mxu_dtype=jnp.bfloat16 (default) feeds the MXU in bf16 with f32 accumulate
    — a deliberate speed/numerics trade.  Pass jnp.float32 for reference-exact
    matmul numerics.
    """
    B, H, S, D = q.shape
    assert D == S, "module semantics require square (S == D) slices"
    assert k.shape == (B, H, S, S) and v.shape == (B, H, S, S)
    assert mask.shape[1:] == (H, S, S) and mask.shape[0] in (1, B)
    # Note: a mask containing -inf (as in the original script's global mask)
    # makes qk@v produce NaNs — that is the module's own behavior, not a bug.

    in_itemsize = jnp.dtype(q.dtype).itemsize
    mxu_itemsize = jnp.dtype(mxu_dtype).itemsize
    tq, need_bytes, vmem_limit = _pick_tiling(S, in_itemsize, mxu_itemsize)
    nq = S // tq

    # q / mask / out: one (tq, S) row tile per grid step.
    q_spec = pl.BlockSpec((1, 1, tq, S), lambda b, h, i: (b, h, i, 0))
    o_spec = pl.BlockSpec((1, 1, tq, S), lambda b, h, i: (b, h, i, 0))
    # k / v: full (S, S) slice; index constant along the q-tile axis so Pallas
    # skips the re-DMA between consecutive row tiles.
    kv_spec = pl.BlockSpec((1, 1, S, S), lambda b, h, i: (b, h, 0, 0))
    # mask: indexed in place — no (B,...) broadcast copy in HBM.
    if mask.shape[0] == B:
        m_spec = pl.BlockSpec((1, 1, tq, S), lambda b, h, i: (b, h, i, 0))
    else:
        m_spec = pl.BlockSpec((1, 1, tq, S), lambda b, h, i: (0, h, i, 0))

    # Only raise the scoped-VMEM limit when the working set would exceed the
    # smallest default (v5e: 16 MiB); cap by the chip's physical capacity.
    compiler_kwargs = {}
    if need_bytes + (2 << 20) > (16 << 20):
        compiler_kwargs["vmem_limit_bytes"] = vmem_limit

    cost = pl.CostEstimate(
        flops=int(6 * B * H * S * S * S),          # three (·,S)x(S,S) matmuls
        transcendentals=int(B * H * S * S),        # exp in the softmax
        bytes_accessed=int((4 * B * H * S * S + mask.size) * in_itemsize),
    )

    kernel = functools.partial(_attn_kernel, mxu_dtype=mxu_dtype)

    return pl.pallas_call(
        kernel,
        out_shape=jax.ShapeDtypeStruct((B, H, S, S), q.dtype),
        grid_spec=pltpu.PrefetchScalarGridSpec(
            num_scalar_prefetch=0,
            grid=(B, H, nq),
            in_specs=[q_spec, kv_spec, kv_spec, m_spec],
            out_specs=o_spec,
        ),
        compiler_params=pltpu.CompilerParams(
            dimension_semantics=("parallel", "parallel", "parallel"),
            **compiler_kwargs),
        cost_estimate=cost,
    )(q, k, v, mask)


def _reference(q, k, v, mask):
    # Pure-jnp reference mirroring the PyTorch forward, full-precision matmuls.
    hp = lax.Precision.HIGHEST
    d = q.shape[-1]
    qk = jnp.einsum("bhqd,bhkd->bhqk", q, k, precision=hp) / math.sqrt(d)
    qk = qk + mask
    aw = jnp.einsum("bhqk,bhkd->bhqd", qk, v, precision=hp)
    aw = jnp.where(mask == 0.0, -1000000000.0, aw)
    aw = jax.nn.softmax(aw.astype(jnp.float32), axis=-1).astype(q.dtype)
    return jnp.einsum("bhqk,bhkd->bhqd", aw, v, precision=hp)


if __name__ == "__main__":
    B, H, S = 2, 4, 8  # small shapes; S == D as the module's matmul chain requires
    key = jax.random.PRNGKey(0)
    kq, kk, kv, km = jax.random.split(key, 4)

    q = jax.random.normal(kq, (B, H, S, S), dtype=jnp.float32)
    k = jax.random.normal(kk, (B, H, S, S), dtype=jnp.float32)
    v = jax.random.normal(kv, (B, H, S, S), dtype=jnp.float32)
    # Mask mixing zeros (exercises masked_fill_) and finite negative bias.
    # (The original script's global mask is all -inf, which only yields NaNs;
    #  finite values keep the example well-defined.)
    mask = jnp.where(jax.random.uniform(km, (1, H, S, S)) > 0.7,
                     jnp.float32(-0.5), jnp.float32(0.0))

    ref = _reference(q, k, v, mask)

    # Reference-precision path (f32 MXU feeds) — tight check.
    out_f32 = jax.block_until_ready(
        attention_model(q, k, v, mask, mxu_dtype=jnp.float32))
    assert out_f32.shape == (B, H, S, S)
    assert jnp.allclose(out_f32, ref, atol=1e-2, rtol=1e-2)

    # Default fast path (bf16 MXU feeds, f32 accumulate) — deliberate numerics
    # deviation from the f32 reference, checked at a coarse tolerance.
    out_fast = jax.block_until_ready(attention_model(q, k, v, mask))
    assert out_fast.shape == (B, H, S, S)
    assert bool(jnp.all(jnp.isfinite(out_fast)))
    assert jnp.allclose(out_fast, ref, atol=0.25, rtol=0.25)

    print("KERNEL_OK")
</pallas_src>

<mosaic_0001>
module attributes {stable_mosaic.version = 11 : i64} {
  func.func @_attn_kernel(%arg0: i32, %arg1: i32, %arg2: i32, %arg3: memref<1x1x8x8xf32, #tpu.memory_space<vmem>>, %arg4: memref<1x1x8x8xf32, #tpu.memory_space<vmem>>, %arg5: memref<1x1x8x8xf32, #tpu.memory_space<vmem>>, %arg6: memref<1x1x8x8xf32, #tpu.memory_space<vmem>>, %arg7: memref<1x1x8x8xf32, #tpu.memory_space<vmem>>) attributes {dimension_semantics = [#tpu.dimension_semantics<parallel>, #tpu.dimension_semantics<parallel>, #tpu.dimension_semantics<parallel>], iteration_bounds = array<i64: 2, 4, 1>, scalar_prefetch = 0 : i64, scratch_operands = 0 : i64, tpu.core_type = #tpu.core_type<tc>, window_params = [{transform_indices = @transform_0, window_bounds = array<i64: 1, 1, 8, 8>}, {transform_indices = @transform_1, window_bounds = array<i64: 1, 1, 8, 8>}, {transform_indices = @transform_2, window_bounds = array<i64: 1, 1, 8, 8>}, {transform_indices = @transform_3, window_bounds = array<i64: 1, 1, 8, 8>}, {transform_indices = @transform_4, window_bounds = array<i64: 1, 1, 8, 8>}]} {
    %c0 = arith.constant 0 : index
    %c0_0 = arith.constant 0 : index
    %c0_1 = arith.constant 0 : index
    %c0_2 = arith.constant 0 : index
    %0 = vector.load %arg3[%c0, %c0_0, %c0_1, %c0_2] : memref<1x1x8x8xf32, #tpu.memory_space<vmem>>, vector<1x1x8x8xf32>
    %1 = vector.shape_cast %0 : vector<1x1x8x8xf32> to vector<8x8xf32>
    %c0_3 = arith.constant 0 : index
    %c0_4 = arith.constant 0 : index
    %c0_5 = arith.constant 0 : index
    %c0_6 = arith.constant 0 : index
    %2 = vector.load %arg4[%c0_3, %c0_4, %c0_5, %c0_6] : memref<1x1x8x8xf32, #tpu.memory_space<vmem>>, vector<1x1x8x8xf32>
    %3 = vector.shape_cast %2 : vector<1x1x8x8xf32> to vector<8x8xf32>
    %c0_7 = arith.constant 0 : index
    %c0_8 = arith.constant 0 : index
    %c0_9 = arith.constant 0 : index
    %c0_10 = arith.constant 0 : index
    %4 = vector.load %arg5[%c0_7, %c0_8, %c0_9, %c0_10] : memref<1x1x8x8xf32, #tpu.memory_space<vmem>>, vector<1x1x8x8xf32>
    %5 = vector.shape_cast %4 : vector<1x1x8x8xf32> to vector<8x8xf32>
    %c0_11 = arith.constant 0 : index
    %c0_12 = arith.constant 0 : index
    %c0_13 = arith.constant 0 : index
    %c0_14 = arith.constant 0 : index
    %6 = vector.load %arg6[%c0_11, %c0_12, %c0_13, %c0_14] : memref<1x1x8x8xf32, #tpu.memory_space<vmem>>, vector<1x1x8x8xf32>
    %7 = vector.shape_cast %6 : vector<1x1x8x8xf32> to vector<8x8xf32>
    %cst = arith.constant dense<0.000000e+00> : vector<8x8xf32>
    %8 = tpu.matmul %1, %3, %cst {dimension_numbers = #tpu.dot_dimension_numbers<[1], [1], [0], [0], [0, 0, 1, 0], [], []>} : vector<8x8xf32>, vector<8x8xf32>, vector<8x8xf32> -> vector<8x8xf32>
    %cst_15 = arith.constant 0.353553385 : f32
    %9 = vector.broadcast %cst_15 : f32 to vector<8x8xf32>
    %10 = arith.mulf %8, %9 : vector<8x8xf32>
    %11 = arith.addf %10, %7 : vector<8x8xf32>
    %cst_16 = arith.constant dense<0.000000e+00> : vector<8x8xf32>
    %12 = tpu.matmul %11, %5, %cst_16 {dimension_numbers = #tpu.dot_dimension_numbers<[1], [0], [0], [1], [0, 0, 1, 1], [], []>} : vector<8x8xf32>, vector<8x8xf32>, vector<8x8xf32> -> vector<8x8xf32>
    %cst_17 = arith.constant 0.000000e+00 : f32
    %13 = vector.broadcast %cst_17 : f32 to vector<8x8xf32>
    %14 = arith.cmpf oeq, %7, %13 : vector<8x8xf32>
    %cst_18 = arith.constant -1.000000e+09 : f32
    %15 = vector.broadcast %cst_18 : f32 to vector<8x8xf32>
    %16 = arith.select %14, %15, %12 : vector<8x8xi1>, vector<8x8xf32>
    %cst_19 = arith.constant dense<0xFF800000> : vector<8xf32>
    %17 = vector.multi_reduction <maximumf>, %16, %cst_19 [1] : vector<8x8xf32> to vector<8xf32>
    %18 = vector.shape_cast %17 : vector<8xf32> to vector<8x1xf32>
    %19 = vector.broadcast %18 : vector<8x1xf32> to vector<8x8xf32>
    %20 = arith.subf %16, %19 : vector<8x8xf32>
    %21 = math.exp %20 : vector<8x8xf32>
    %cst_20 = arith.constant dense<0.000000e+00> : vector<8xf32>
    %22 = vector.multi_reduction <add>, %21, %cst_20 [1] : vector<8x8xf32> to vector<8xf32>
    %23 = vector.shape_cast %22 : vector<8xf32> to vector<8x1xf32>
    %24 = tpu.reciprocal %23 {approx = true} : vector<8x1xf32> -> vector<8x1xf32>
    %25 = vector.broadcast %24 : vector<8x1xf32> to vector<8x8xf32>
    %26 = arith.mulf %21, %25 : vector<8x8xf32>
    %cst_21 = arith.constant dense<0.000000e+00> : vector<8x8xf32>
    %27 = tpu.matmul %26, %5, %cst_21 {dimension_numbers = #tpu.dot_dimension_numbers<[1], [0], [0], [1], [0, 0, 1, 1], [], []>} : vector<8x8xf32>, vector<8x8xf32>, vector<8x8xf32> -> vector<8x8xf32>
    %c0_22 = arith.constant 0 : index
    %c0_23 = arith.constant 0 : index
    %c0_24 = arith.constant 0 : index
    %c0_25 = arith.constant 0 : index
    %28 = vector.load %arg7[%c0_22, %c0_23, %c0_24, %c0_25] : memref<1x1x8x8xf32, #tpu.memory_space<vmem>>, vector<1x1x8x8xf32>
    %29 = vector.shape_cast %28 : vector<1x1x8x8xf32> to vector<8x8xf32>
    %30 = vector.shape_cast %27 : vector<8x8xf32> to vector<1x1x8x8xf32>
    tpu.vector_store %arg7[%c0_22, %c0_23, %c0_24, %c0_25], %30 {strides = array<i32>} : memref<1x1x8x8xf32, #tpu.memory_space<vmem>>, vector<1x1x8x8xf32>,
    return
  }
  func.func @transform_0(%arg0: i32, %arg1: i32, %arg2: i32) -> (i32, i32, i32, i32) {
    %c0_i32 = arith.constant 0 : i32
    %c0_i32_0 = arith.constant 0 : i32
    return %arg0, %arg1, %arg2, %c0_i32 : i32, i32, i32, i32
  }
  func.func @transform_1(%arg0: i32, %arg1: i32, %arg2: i32) -> (i32, i32, i32, i32) {
    %c0_i32 = arith.constant 0 : i32
    %c0_i32_0 = arith.constant 0 : i32
    %c0_i32_1 = arith.constant 0 : i32
    return %arg0, %arg1, %c0_i32, %c0_i32_0 : i32, i32, i32, i32
  }
  func.func @transform_2(%arg0: i32, %arg1: i32, %arg2: i32) -> (i32, i32, i32, i32) {
    %c0_i32 = arith.constant 0 : i32
    %c0_i32_0 = arith.constant 0 : i32
    %c0_i32_1 = arith.constant 0 : i32
    return %arg0, %arg1, %c0_i32, %c0_i32_0 : i32, i32, i32, i32
  }
  func.func @transform_3(%arg0: i32, %arg1: i32, %arg2: i32) -> (i32, i32, i32, i32) {
    %c0_i32 = arith.constant 0 : i32
    %c0_i32_0 = arith.constant 0 : i32
    %c0_i32_1 = arith.constant 0 : i32
    return %c0_i32, %arg1, %arg2, %c0_i32_0 : i32, i32, i32, i32
  }
  func.func @transform_4(%arg0: i32, %arg1: i32, %arg2: i32) -> (i32, i32, i32, i32) {
    %c0_i32 = arith.constant 0 : i32
    %c0_i32_0 = arith.constant 0 : i32
    return %arg0, %arg1, %arg2, %c0_i32 : i32, i32, i32, i32
  }
}

</mosaic_0001>

<llo_original>
// kernel: tpu_custom_call.1
$region0: #{tpu_custom_call.1}
  #allocation0 [shape = 'u32[]', space=smem, size = 0x4, offset = 0x4, fixed_abs, tag = 'smem constant byte address 0x4 - core index']
  #allocation1 [shape = 'u32[72,128]{1,0:T(1,128)}', space=vmem, size = 0x9000, scoped, tag = 'internal scratch']
  %s0 = inlined_call_operand.hbm [shape: f32[2,4,8,8], index: 0, kind: input, shape index: {}]
  %s1 = inlined_call_operand.hbm [shape: f32[2,4,8,8], index: 1, kind: input, shape index: {}]
  %s2 = inlined_call_operand.hbm [shape: f32[2,4,8,8], index: 2, kind: input, shape index: {}]
  %s3 = inlined_call_operand.hbm [shape: f32[1,4,8,8], index: 3, kind: input, shape index: {}]
  %s4 = inlined_call_operand.hbm [shape: f32[2,4,8,8], index: 4, kind: output, shape index: {}]
  %s5 = sld [smem:[#allocation0]]
  $region65: #{tpu_custom_call.1} parent=0
    _
  %s7 = ssub.s32 1, %s5
  %s8 = scalar_select 0, %s7, %s5
  $region1: #{tpu_custom_call.1} parent=0
    #allocation2 [shape = 'u8[8192]{0}', space=vmem, size = 0x2000, scoped, tag = 'input window, operand 0']
    #allocation3 [shape = 's32[2]{0}', space=sflag, size = 0x8, scoped, tag = 'scoped memory for tpu_custom_call.1']
    #allocation4 [shape = 's32[2]{0}', space=sflag, size = 0x8, scoped, tag = 'scoped memory for tpu_custom_call.1']
    #allocation5 [shape = 'u8[8192]{0}', space=vmem, size = 0x2000, scoped, tag = 'input window, operand 1']
    #allocation6 [shape = 's32[2]{0}', space=sflag, size = 0x8, scoped, tag = 'scoped memory for tpu_custom_call.1']
    #allocation7 [shape = 'u8[8192]{0}', space=vmem, size = 0x2000, scoped, tag = 'input window, operand 2']
    #allocation8 [shape = 'u8[8192]{0}', space=vmem, size = 0x2000, scoped, tag = 'input window, operand 3']
    #allocation9 [shape = 's32[2]{0}', space=sflag, size = 0x8, scoped, tag = 'scoped memory for tpu_custom_call.1']
    #allocation10 [shape = 'u8[8192]{0}', space=vmem, size = 0x2000, scoped, tag = 'output window, operand 0']
    %9 = vsyncpa [#allocation3], 0
    %s10 = scalar_lea.sflag [#allocation3], 1
    %11 = vsyncpa %s10, 0
    %12 = vsyncpa [#allocation6], 0
    %s13 = scalar_lea.sflag [#allocation6], 1
    %14 = vsyncpa %s13, 0
    %15 = vsyncpa [#allocation9], 0
    %s16 = scalar_lea.sflag [#allocation9], 1
    %17 = vsyncpa %s16, 0
    %18 = vsyncpa [#allocation4], 0
    %s19 = scalar_lea.sflag [#allocation4], 1
    %20 = vsyncpa %s19, 0
    loop: start=0, step=1, limit=10
    $region2: #{tpu_custom_call.1} parent=1 // loop_pre_header
      _
    $region3: #{tpu_custom_call.1} parent=1 // loop_header
      %s22 = sphi 0, %s26
      %p23 = scmp.ge.s32.totalorder %s22, 10
      %s29 = sphi 0, %s48
      %s30 = sphi 0, %s44
      %s31 = sphi 0, %s40
      %s32 = sphi 0, %s29
      %s33 = sphi 0, %s30
      %s34 = sphi 0, %s31
      %s35 = sphi 0, %s32
      %s36 = sphi 0, %s33
      %s37 = sphi 0, %s34
      %s55 = sphi 0, %s57
      %s58 = sphi 0, %s55
      %s59 = sphi 0, %s58
      %s75 = sphi 0, %s59
      %s83 = sphi 0, %s85
      %s86 = sphi 0, %s83
      %s87 = sphi 0, %s86
      %s103 = sphi 0, %s87
      %s111 = sphi 0, %s113
      %s114 = sphi 0, %s111
      %s115 = sphi 0, %s114
      %s131 = sphi 0, %s115
      %s139 = sphi 0, %s141
      %s142 = sphi 0, %s139
      %s143 = sphi 0, %s142
      %s159 = sphi 0, %s143
      %s169 = sphi 0, %s171
      %s172 = sphi 0, %s169
      %s173 = sphi 0, %s172
      %s189 = sphi 0, %s173
    $region4: #{tpu_custom_call.1} parent=1 // loop_header_branch
      %25 = sbr.rel (%p23) target = $region8
    $region5: #{tpu_custom_call.1} parent=1 // loop_body
      %s27 = ssub.s32 %s22, 1
      %s28 = ssub.s32 %s22, 2
      %s38 = sadd.s32 1, %s31
      %p39 = scmp.ge.s32.totalorder %s38, 1
      %s40 = scalar_select %p39, 0, %s38
      %s41 = sadd.s32 1, %s30
      %s42 = scalar_select %p39, %s41, %s30
      %p43 = scmp.ge.s32.totalorder %s42, 4
      %s44 = scalar_select %p43, 0, %s42
      %s45 = sadd.s32 1, %s29
      %s46 = scalar_select %p43, %s45, %s29
      %p47 = scmp.ge.s32.totalorder %s46, 2
      %s48 = scalar_select %p47, 0, %s46
      %s49 = ssub.s32 %s29, %s48
      %s50 = ssub.s32 %s30, %s44
      %s51 = sor.u32 %s49, %s50
      %s52 = ssub.s32 %s31, %s40
      %s53 = sor.u32 %s51, %s52
      %p54 = scmp.eq.s32.totalorder %s53, 0
      %s56 = sadd.s32 %s55, 1
      %s57 = scalar_select %p54, %s55, %s56
      %p60 = pneg %p54
      %p61 = scmp.eq.s32.totalorder %s22, 7
      %p62 = por %p60, %p61
      %p63 = scmp.ne.s32.totalorder %s55, %s58
      %p64 = scmp.eq.s32.totalorder %s22, 0
      %p65 = por %p63, %p64
      %p66 = scmp.ne.s32.totalorder %s55, %s58
      %p67 = scmp.eq.s32.totalorder %s27, 7
      %p68 = por %p66, %p67
      %p69 = scmp.ne.s32.totalorder %s58, %s59
      %p70 = scmp.eq.s32.totalorder %s27, 0
      %p71 = por %p69, %p70
      %p72 = scmp.ne.s32.totalorder %s58, %s59
      %p73 = scmp.eq.s32.totalorder %s28, 7
      %p74 = por %p72, %p73
      %p76 = scmp.ne.s32.totalorder %s59, %s75
      %p77 = scmp.eq.s32.totalorder %s28, 0
      %p78 = por %p76, %p77
      %s79 = ssub.s32 %s29, %s48
      %s80 = ssub.s32 %s30, %s44
      %s81 = sor.u32 %s79, %s80
      %p82 = scmp.eq.s32.totalorder %s81, 0
      %s84 = sadd.s32 %s83, 1
      %s85 = scalar_select %p82, %s83, %s84
      %p88 = pneg %p82
      %p89 = scmp.eq.s32.totalorder %s22, 7
      %p90 = por %p88, %p89
      %p91 = scmp.ne.s32.totalorder %s83, %s86
      %p92 = scmp.eq.s32.totalorder %s22, 0
      %p93 = por %p91, %p92
      %p94 = scmp.ne.s32.totalorder %s83, %s86
      %p95 = scmp.eq.s32.totalorder %s27, 7
      %p96 = por %p94, %p95
      %p97 = scmp.ne.s32.totalorder %s86, %s87
      %p98 = scmp.eq.s32.totalorder %s27, 0
      %p99 = por %p97, %p98
      %p100 = scmp.ne.s32.totalorder %s86, %s87
      %p101 = scmp.eq.s32.totalorder %s28, 7
      %p102 = por %p100, %p101
      %p104 = scmp.ne.s32.totalorder %s87, %s103
      %p105 = scmp.eq.s32.totalorder %s28, 0
      %p106 = por %p104, %p105
      %s107 = ssub.s32 %s29, %s48
      %s108 = ssub.s32 %s30, %s44
      %s109 = sor.u32 %s107, %s108
      %p110 = scmp.eq.s32.totalorder %s109, 0
      %s112 = sadd.s32 %s111, 1
      %s113 = scalar_select %p110, %s111, %s112
      %p116 = pneg %p110
      %p117 = scmp.eq.s32.totalorder %s22, 7
      %p118 = por %p116, %p117
      %p119 = scmp.ne.s32.totalorder %s111, %s114
      %p120 = scmp.eq.s32.totalorder %s22, 0
      %p121 = por %p119, %p120
      %p122 = scmp.ne.s32.totalorder %s111, %s114
      %p123 = scmp.eq.s32.totalorder %s27, 7
      %p124 = por %p122, %p123
      %p125 = scmp.ne.s32.totalorder %s114, %s115
      %p126 = scmp.eq.s32.totalorder %s27, 0
      %p127 = por %p125, %p126
      %p128 = scmp.ne.s32.totalorder %s114, %s115
      %p129 = scmp.eq.s32.totalorder %s28, 7
      %p130 = por %p128, %p129
      %p132 = scmp.ne.s32.totalorder %s115, %s131
      %p133 = scmp.eq.s32.totalorder %s28, 0
      %p134 = por %p132, %p133
      %s135 = ssub.s32 %s30, %s44
      %s136 = ssub.s32 %s31, %s40
      %s137 = sor.u32 %s135, %s136
      %p138 = scmp.eq.s32.totalorder %s137, 0
      %s140 = sadd.s32 %s139, 1
      %s141 = scalar_select %p138, %s139, %s140
      %p144 = pneg %p138
      %p145 = scmp.eq.s32.totalorder %s22, 7
      %p146 = por %p144, %p145
      %p147 = scmp.ne.s32.totalorder %s139, %s142
      %p148 = scmp.eq.s32.totalorder %s22, 0
      %p149 = por %p147, %p148
      %p150 = scmp.ne.s32.totalorder %s139, %s142
      %p151 = scmp.eq.s32.totalorder %s27, 7
      %p152 = por %p150, %p151
      %p153 = scmp.ne.s32.totalorder %s142, %s143
      %p154 = scmp.eq.s32.totalorder %s27, 0
      %p155 = por %p153, %p154
      %p156 = scmp.ne.s32.totalorder %s142, %s143
      %p157 = scmp.eq.s32.totalorder %s28, 7
      %p158 = por %p156, %p157
      %p160 = scmp.ne.s32.totalorder %s143, %s159
      %p161 = scmp.eq.s32.totalorder %s28, 0
      %p162 = por %p160, %p161
      %s163 = ssub.s32 %s29, %s48
      %s164 = ssub.s32 %s30, %s44
      %s165 = sor.u32 %s163, %s164
      %s166 = ssub.s32 %s31, %s40
      %s167 = sor.u32 %s165, %s166
      %p168 = scmp.eq.s32.totalorder %s167, 0
      %s170 = sadd.s32 %s169, 1
      %s171 = scalar_select %p168, %s169, %s170
      %p174 = pneg %p168
      %p175 = scmp.eq.s32.totalorder %s22, 7
      %p176 = por %p174, %p175
      %p177 = scmp.ne.s32.totalorder %s169, %s172
      %p178 = scmp.eq.s32.totalorder %s22, 0
      %p179 = por %p177, %p178
      %p180 = scmp.ne.s32.totalorder %s169, %s172
      %p181 = scmp.eq.s32.totalorder %s27, 7
      %p182 = por %p180, %p181
      %p183 = scmp.ne.s32.totalorder %s172, %s173
      %p184 = scmp.eq.s32.totalorder %s27, 0
      %p185 = por %p183, %p184
      %p186 = scmp.ne.s32.totalorder %s172, %s173
      %p187 = scmp.eq.s32.totalorder %s28, 7
      %p188 = por %p186, %p187
      %p190 = scmp.ne.s32.totalorder %s173, %s189
      %p191 = scmp.eq.s32.totalorder %s28, 0
      %p192 = por %p190, %p191
      %p193 = scmp.le.s32.totalorder 1, %s22
      %p194 = scmp.lt.s32.totalorder %s22, 9
      %p195 = pnand %p193, %p194
      %p196 = pneg %p195
      // Predicated region
      $region9: #{tpu_custom_call.1} parent=5 // pred_check
        _
      $region10: #{tpu_custom_call.1} parent=5 // pred_check_branch
        %198 = sbr.rel (%p195) target = $region12
      $region11: #{tpu_custom_call.1} parent=5 // pred_region
        %s199 = ssub.s32 %s22, 1
      $region12: #{tpu_custom_call.1} parent=5 // pred_fallthru
        _
      %p200 = scmp.lt.s32.totalorder %s22, 8
      // Predicated region
      $region13: #{tpu_custom_call.1} parent=5 // pred_check
        %p201 = pneg %p200
      $region14: #{tpu_custom_call.1} parent=5 // pred_check_branch
        %203 = sbr.rel (%p201) target = $region16
      $region15: #{tpu_custom_call.1} parent=5 // pred_region
        // Predicated region
        $region17: #{tpu_custom_call.1} parent=15 // pred_check
          %p204 = pneg %p65
        $region18: #{tpu_custom_call.1} parent=15 // pred_check_branch
          %206 = sbr.rel (%p204) target = $region20
        $region19: #{tpu_custom_call.1} parent=15 // pred_region
          %s207 = sand.u32 %s55, 1
          %s208 = scalar_lea.sflag [#allocation3], %s207
          %s209 = sand.u32 %s55, 1
          %s210 = smul.addr %s209, 8
          %s211 = scalar_lea.vmem [#allocation2], %s210
          %213 = vsyncadd %s208, 0
          %s214 = sadd.s32 %s31, %s30
          %s215 = smul.addr %s29, 4
          %s216 = sadd.s32 %s214, %s215
          %s217 = smul.addr %s216, 8
          %s218 = scalar_lea.hbm %s0, %s217
          %s220 = sshll.u32 %s218, 4
          %s221 = int_to_ptr.hbm [resolvable:$true] %s220
          %s222 = sshll.u32 %s211, 4
          %s223 = int_to_ptr.vmem [resolvable:$true] %s222
          %225 = dma.hbm_to_vmem [thread:$0]  %s221, 128, %s223, %s208
        $region20: #{tpu_custom_call.1} parent=15 // pred_fallthru
          _
        // Predicated region
        $region21: #{tpu_custom_call.1} parent=15 // pred_check
          %p226 = pneg %p93
        $region22: #{tpu_custom_call.1} parent=15 // pred_check_branch
          %228 = sbr.rel (%p226) target = $region24
        $region23: #{tpu_custom_call.1} parent=15 // pred_region
          %s229 = sand.u32 %s22, 1
          %s230 = scalar_lea.sflag [#allocation6], %s229
          %s231 = sand.u32 %s83, 1
          %s232 = smul.addr %s231, 8
          %s233 = scalar_lea.vmem [#allocation5], %s232
          %235 = vsyncadd %s230, 0
          %s236 = smul.addr %s29, 4
          %s237 = sadd.s32 %s30, %s236
          %s238 = smul.addr %s237, 8
          %s239 = scalar_lea.hbm %s1, %s238
          %s241 = sshll.u32 %s239, 4
          %s242 = int_to_ptr.hbm [resolvable:$true] %s241
          %s243 = sshll.u32 %s233, 4
          %s244 = int_to_ptr.vmem [resolvable:$true] %s243
          %246 = dma.hbm_to_vmem [thread:$0]  %s242, 128, %s244, %s230
        $region24: #{tpu_custom_call.1} parent=15 // pred_fallthru
          _
        // Predicated region
        $region25: #{tpu_custom_call.1} parent=15 // pred_check
          %p247 = pneg %p121
        $region26: #{tpu_custom_call.1} parent=15 // pred_check_branch
          %249 = sbr.rel (%p247) target = $region28
        $region27: #{tpu_custom_call.1} parent=15 // pred_region
          %s250 = sand.u32 %s22, 1
          %s251 = scalar_lea.sflag [#allocation6], %s250
          %s252 = sand.u32 %s111, 1
          %s253 = smul.addr %s252, 8
          %s254 = scalar_lea.vmem [#allocation7], %s253
          %256 = vsyncadd %s251, 0
          %s257 = smul.addr %s29, 4
          %s258 = sadd.s32 %s30, %s257
          %s259 = smul.addr %s258, 8
          %s260 = scalar_lea.hbm %s2, %s259
          %s262 = sshll.u32 %s260, 4
          %s263 = int_to_ptr.hbm [resolvable:$true] %s262
          %s264 = sshll.u32 %s254, 4
          %s265 = int_to_ptr.vmem [resolvable:$true] %s264
          %267 = dma.hbm_to_vmem [thread:$0]  %s263, 128, %s265, %s251
        $region28: #{tpu_custom_call.1} parent=15 // pred_fallthru
          _
        // Predicated region
        $region29: #{tpu_custom_call.1} parent=15 // pred_check
          %p268 = pneg %p149
        $region30: #{tpu_custom_call.1} parent=15 // pred_check_branch
          %270 = sbr.rel (%p268) target = $region32
        $region31: #{tpu_custom_call.1} parent=15 // pred_region
          %s271 = sand.u32 %s139, 1
          %s272 = scalar_lea.sflag [#allocation9], %s271
          %s273 = sand.u32 %s139, 1
          %s274 = smul.addr %s273, 8
          %s275 = scalar_lea.vmem [#allocation8], %s274
          %277 = vsyncadd %s272, 0
          %s278 = sadd.s32 %s31, %s30
          %s279 = smul.addr %s278, 8
          %s280 = scalar_lea.hbm %s3, %s279
          %s282 = sshll.u32 %s280, 4
          %s283 = int_to_ptr.hbm [resolvable:$true] %s282
          %s284 = sshll.u32 %s275, 4
          %s285 = int_to_ptr.vmem [resolvable:$true] %s284
          %287 = dma.hbm_to_vmem [thread:$0]  %s283, 128, %s285, %s272
        $region32: #{tpu_custom_call.1} parent=15 // pred_fallthru
          _
      $region16: #{tpu_custom_call.1} parent=5 // pred_fallthru
        _
      %p288 = scmp.le.s32.totalorder 1, %s22
      %p289 = scmp.lt.s32.totalorder %s22, 9
      %p290 = pnand %p288, %p289
      %p291 = pneg %p290
      // Predicated region
      $region33: #{tpu_custom_call.1} parent=5 // pred_check
        _
      $region34: #{tpu_custom_call.1} parent=5 // pred_check_branch
        %293 = sbr.rel (%p290) target = $region36
      $region35: #{tpu_custom_call.1} parent=5 // pred_region
        %s294 = ssub.s32 %s22, 1
        %s295 = sand.u32 %s58, 1
        %s296 = scalar_lea.sflag [#allocation3], %s295
        %s297 = sand.u32 %s58, 1
        %s298 = smul.addr %s297, 8
        %s299 = scalar_lea.vmem [#allocation2], %s298
        // Predicated region
        $region37: #{tpu_custom_call.1} parent=35 // pred_check
          %p300 = pneg %p71
        $region38: #{tpu_custom_call.1} parent=35 // pred_check_branch
          %302 = sbr.rel (%p300) target = $region40
        $region39: #{tpu_custom_call.1} parent=35 // pred_region
          %304 = dma.done %s296, 128
        $region40: #{tpu_custom_call.1} parent=35 // pred_fallthru
          _
        %s305 = sand.u32 %s27, 1
        %s306 = scalar_lea.sflag [#allocation6], %s305
        %s307 = sand.u32 %s86, 1
        %s308 = smul.addr %s307, 8
        %s309 = scalar_lea.vmem [#allocation5], %s308
        // Predicated region
        $region41: #{tpu_custom_call.1} parent=35 // pred_check
          %p310 = pneg %p99
        $region42: #{tpu_custom_call.1} parent=35 // pred_check_branch
          %312 = sbr.rel (%p310) target = $region44
        $region43: #{tpu_custom_call.1} parent=35 // pred_region
          %314 = dma.done %s306, 128
        $region44: #{tpu_custom_call.1} parent=35 // pred_fallthru
          _
        %s315 = sand.u32 %s27, 1
        %s316 = scalar_lea.sflag [#allocation6], %s315
        %s317 = sand.u32 %s114, 1
        %s318 = smul.addr %s317, 8
        %s319 = scalar_lea.vmem [#allocation7], %s318
        // Predicated region
        $region45: #{tpu_custom_call.1} parent=35 // pred_check
          %p320 = pneg %p127
        $region46: #{tpu_custom_call.1} parent=35 // pred_check_branch
          %322 = sbr.rel (%p320) target = $region48
        $region47: #{tpu_custom_call.1} parent=35 // pred_region
          %324 = dma.done %s316, 128
        $region48: #{tpu_custom_call.1} parent=35 // pred_fallthru
          _
        %s325 = sand.u32 %s142, 1
        %s326 = scalar_lea.sflag [#allocation9], %s325
        %s327 = sand.u32 %s142, 1
        %s328 = smul.addr %s327, 8
        %s329 = scalar_lea.vmem [#allocation8], %s328
        // Predicated region
        $region49: #{tpu_custom_call.1} parent=35 // pred_check
          %p330 = pneg %p155
        $region50: #{tpu_custom_call.1} parent=35 // pred_check_branch
          %332 = sbr.rel (%p330) target = $region52
        $region51: #{tpu_custom_call.1} parent=35 // pred_region
          %334 = dma.done %s326, 128
        $region52: #{tpu_custom_call.1} parent=35 // pred_fallthru
          _
        %s335 = sand.u32 %s58, 1
        %s336 = scalar_lea.sflag [#allocation3], %s335
        %s337 = sand.u32 %s58, 1
        %s338 = smul.addr %s337, 8
        %s339 = scalar_lea.vmem [#allocation2], %s338
        %p340 = pneg %p71
        %p341 = pneg %p68
        %s342 = sand.u32 %s27, 1
        %s343 = scalar_lea.sflag [#allocation6], %s342
        %s344 = sand.u32 %s86, 1
        %s345 = smul.addr %s344, 8
        %s346 = scalar_lea.vmem [#allocation5], %s345
        %p347 = pneg %p99
        %p348 = pneg %p96
        %s349 = sand.u32 %s27, 1
        %s350 = scalar_lea.sflag [#allocation6], %s349
        %s351 = sand.u32 %s114, 1
        %s352 = smul.addr %s351, 8
        %s353 = scalar_lea.vmem [#allocation7], %s352
        %p354 = pneg %p127
        %p355 = pneg %p124
        %s356 = sand.u32 %s142, 1
        %s357 = scalar_lea.sflag [#allocation9], %s356
        %s358 = sand.u32 %s142, 1
        %s359 = smul.addr %s358, 8
        %s360 = scalar_lea.vmem [#allocation8], %s359
        %p361 = pneg %p155
        %p362 = pneg %p152
        %p363 = pneg %p185
        %p364 = pneg %p182
        %s365 = sand.u32 %s172, 1
        %s366 = scalar_lea.sflag [#allocation4], %s365
        %s367 = sand.u32 %s172, 1
        %s368 = smul.addr %s367, 8
        %s369 = scalar_lea.vmem [#allocation10], %s368
        %v370 = vld [vmem:[%s299] sm:$0xff]
        %v371 = vld [vmem:[%s309] sm:$0xff]
        %v372 = vld [vmem:[%s319] sm:$0xff]
        %v373 = vld [vmem:[%s329] sm:$0xff]
        %vm374 = vcmask 64512
        %v376 = vsel %vm374, %v370, 0
        %v379 = vsel %vm374, %v371, 0
        %381 = vmatpush.xpose.msra.mxu0 0.0
        %382 = vmatpush.xpose.msra.mxu0 0.0
        %383 = vmatpush.xpose.msra.mxu0 0.0
        %384 = vmatpush.xpose.msra.mxu0 0.0
        %385 = vmatpush.xpose.msra.mxu0 0.0
        %386 = vmatpush.xpose.msra.mxu0 0.0
        %387 = vmatpush.xpose.msra.mxu0 0.0
        %388 = vmatpush.xpose.msra.mxu0 0.0
        %389 = vmatpush.xpose.msra.mxu0 0.0
        %390 = vmatpush.xpose.msra.mxu0 0.0
        %391 = vmatpush.xpose.msra.mxu0 0.0
        %392 = vmatpush.xpose.msra.mxu0 0.0
        %393 = vmatpush.xpose.msra.mxu0 0.0
        %394 = vmatpush.xpose.msra.mxu0 0.0
        %395 = vmatpush.xpose.msra.mxu0 0.0
        %396 = vmatpush.xpose.msra.mxu0 %v379
        %397 = vmatmul.f32.gmra.mxu0 %v376
        %v398 = vpop.f32.mrf.mxu0
        %v399 = vadd.f32 0.0, %v398
        %400 = vdwg.mxu0
        %v401 = vmul.f32 %v399, 0.35355338
        %v402 = vadd.f32 %v401, %v373
        %v404 = vsel %vm374, %v402, 0
        %406 = vmatpush.msra.mxu0 0.0
        %407 = vmatpush.msra.mxu0 0.0
        %408 = vmatpush.msra.mxu0 0.0
        %409 = vmatpush.msra.mxu0 0.0
        %410 = vmatpush.msra.mxu0 0.0
        %411 = vmatpush.msra.mxu0 0.0
        %412 = vmatpush.msra.mxu0 0.0
        %413 = vmatpush.msra.mxu0 0.0
        %414 = vmatpush.msra.mxu0 0.0
        %415 = vmatpush.msra.mxu0 0.0
        %416 = vmatpush.msra.mxu0 0.0
        %417 = vmatpush.msra.mxu0 0.0
        %418 = vmatpush.msra.mxu0 0.0
        %419 = vmatpush.msra.mxu0 0.0
        %420 = vmatpush.msra.mxu0 0.0
        %421 = vmatpush.msra.mxu0 %v372
        %422 = vmatmul.f32.gmra.mxu0 %v404
        %v423 = vpop.f32.mrf.mxu0
        %v424 = vadd.f32 0.0, %v423
        %425 = vdwg.mxu0
        %vm426 = vcmp.eq.f32.partialorder %v373, 0.0
        %v427 = vsel %vm426, -1e+09, %v424
        %v428 = vsel %vm374, %v427, -inf
        %429 = vmax.xlane.f32.xlu0 %v428
        %v430 = vpop.xlane.xlu0 %429
        %v431 = vsub.f32 %v427, %v430
        %v432 = vmul.f32 %v431, 1.442695
        %v433 = vpow.pop %v432
        %v434 = vsel %vm374, %v433, 0.0
        %435 = vadd.xlane.f32.xlu0 %v434
        %v436 = vpop.xlane.xlu0 %435
        %v437 = vrcp.pop %v436
        %v438 = vmul.f32 %v433, %v437
        %v440 = vsel %vm374, %v438, 0
        %442 = vmatpush.msra.mxu0 0.0
        %443 = vmatpush.msra.mxu0 0.0
        %444 = vmatpush.msra.mxu0 0.0
        %445 = vmatpush.msra.mxu0 0.0
        %446 = vmatpush.msra.mxu0 0.0
        %447 = vmatpush.msra.mxu0 0.0
        %448 = vmatpush.msra.mxu0 0.0
        %449 = vmatpush.msra.mxu0 0.0
        %450 = vmatpush.msra.mxu0 0.0
        %451 = vmatpush.msra.mxu0 0.0
        %452 = vmatpush.msra.mxu0 0.0
        %453 = vmatpush.msra.mxu0 0.0
        %454 = vmatpush.msra.mxu0 0.0
        %455 = vmatpush.msra.mxu0 0.0
        %456 = vmatpush.msra.mxu0 0.0
        %457 = vmatpush.msra.mxu0 %v372
        %458 = vmatmul.f32.gmra.mxu0 %v440
        %v459 = vpop.f32.mrf.mxu0
        %v460 = vadd.f32 0.0, %v459
        %461 = vdwg.mxu0
        %462 = vst.msk [vmem:[%s369] sm:$0xff] %vm374, %v460
        %s463 = sand.u32 %s172, 1
        %s464 = scalar_lea.sflag [#allocation4], %s463
        %s465 = sand.u32 %s172, 1
        %s466 = smul.addr %s465, 8
        %s467 = scalar_lea.vmem [#allocation10], %s466
        // Predicated region
        $region53: #{tpu_custom_call.1} parent=35 // pred_check
          %p468 = pneg %p182
        $region54: #{tpu_custom_call.1} parent=35 // pred_check_branch
          %470 = sbr.rel (%p468) target = $region56
        $region55: #{tpu_custom_call.1} parent=35 // pred_region
          %472 = vsyncadd %s464, 0
          %s473 = sadd.s32 %s34, %s33
          %s474 = smul.addr %s32, 4
          %s475 = sadd.s32 %s473, %s474
          %s476 = smul.addr %s475, 8
          %s477 = scalar_lea.hbm %s4, %s476
          %s479 = sshll.u32 %s467, 4
          %s480 = int_to_ptr.vmem [resolvable:$true] %s479
          %s481 = sshll.u32 %s477, 4
          %s482 = int_to_ptr.hbm [resolvable:$true] %s481
          %484 = dma.vmem_to_hbm [thread:$0]  %s480, 128, %s482, %s464
        $region56: #{tpu_custom_call.1} parent=35 // pred_fallthru
          _
      $region36: #{tpu_custom_call.1} parent=5 // pred_fallthru
        _
      %p485 = scmp.le.s32.totalorder 2, %s22
      // Predicated region
      $region57: #{tpu_custom_call.1} parent=5 // pred_check
        %p486 = pneg %p485
      $region58: #{tpu_custom_call.1} parent=5 // pred_check_branch
        %488 = sbr.rel (%p486) target = $region60
      $region59: #{tpu_custom_call.1} parent=5 // pred_region
        %s489 = ssub.s32 %s22, 2
        // Predicated region
        $region61: #{tpu_custom_call.1} parent=59 // pred_check
          %p490 = pneg %p188
        $region62: #{tpu_custom_call.1} parent=59 // pred_check_branch
          %492 = sbr.rel (%p490) target = $region64
        $region63: #{tpu_custom_call.1} parent=59 // pred_region
          %s493 = sand.u32 %s173, 1
          %s494 = scalar_lea.sflag [#allocation4], %s493
          %s495 = sand.u32 %s173, 1
          %s496 = smul.addr %s495, 8
          %s497 = scalar_lea.vmem [#allocation10], %s496
          %499 = dma.done %s494, 128
        $region64: #{tpu_custom_call.1} parent=59 // pred_fallthru
          _
      $region60: #{tpu_custom_call.1} parent=5 // pred_fallthru
        _
    $region6: #{tpu_custom_call.1} parent=1 // loop_footer
      %s26 = sadd.s32 1, %s22
    $region7: #{tpu_custom_call.1} parent=1 // loop_footer_branch
      %21 = sbr.rel target = $region3
    $region8: #{tpu_custom_call.1} parent=1 // loop_exit
      _
    %500 = vsyncpa [#allocation3], 1
    %s501 = scalar_lea.sflag [#allocation3], 1
    %502 = vsyncpa %s501, 1
    %503 = vsyncpa [#allocation6], 1
    %s504 = scalar_lea.sflag [#allocation6], 1
    %505 = vsyncpa %s504, 1
    %506 = vsyncpa [#allocation9], 1
    %s507 = scalar_lea.sflag [#allocation9], 1
    %508 = vsyncpa %s507, 1
    %509 = vsyncpa [#allocation4], 1
    %s510 = scalar_lea.sflag [#allocation4], 1
    %511 = vsyncpa %s510, 1

</llo_original>
